<compile_context>
chip_gen: v6e
topology: v6e:2x2x1
jax: 0.10.0
libtpu: 0.0.40
codegen_flags: <defaults>
</compile_context>

<pallas_src>
import functools

import jax
import jax.numpy as jnp
from jax.experimental import pallas as pl
from jax.experimental.pallas import tpu as pltpu

IN_F = 10    # linear1 in_features
HID_F = 10   # linear1 out_features / linear2 in_features
OUT_F = 2    # linear2 out_features

# --- VMEM budgeting ---------------------------------------------------------
# Per batch element (f32):
#   x block (tile_b, 10) lane-pads to 128 lanes -> 512 B per buffer, x2 buffers
#   out block (2->8 sublanes, tile_b)           ->  32 B per buffer, x2 buffers
#   sublane/lane-padded intermediates + compiler temporaries ~ a few hundred B
# At tile_b = 16384 that is ~16 MiB (x) + ~1 MiB (out) + ~5-6 MiB (temps)
# ~= 22 MiB actual footprint: inside the 48 MiB scoped limit below, and small
# enough that two v7x TensorCores (64 MiB physical VMEM) both stay resident.
_VMEM_LIMIT_BYTES = 48 * 1024 * 1024
_MAX_TILE_B = 16384
_DEFAULT_TILE_B = _MAX_TILE_B


def _round_up(v, m):
    return ((v + m - 1) // m) * m


def predictor_kernel(x_ref, w1_ref, b1_ref, w2_ref, b2_ref, o_ref):
    # x_ref: (TILE_B, IN_F) — natural PyTorch layout, batch on the sublane axis.
    # Weights stay in PyTorch (out, in) layout.
    x = x_ref[...]

    # linear1 + ReLU, produced feature-major straight off the MXU:
    #   h^T = W1 @ x^T + b1   (contract W1 dim 1 against x dim 1 -> (HID_F, TILE_B))
    h = jax.lax.dot_general(
        w1_ref[...], x,
        dimension_numbers=(((1,), (1,)), ((), ())),
        preferred_element_type=jnp.float32,
        precision=jax.lax.Precision.HIGHEST)
    h = jnp.maximum(h + b1_ref[...], 0.0)                    # (HID_F, TILE_B)

    # linear2:  logits^T = W2 @ h^T + b2                      (OUT_F, TILE_B)
    logits = jnp.dot(w2_ref[...], h,
                     preferred_element_type=jnp.float32,
                     precision=jax.lax.Precision.HIGHEST) + b2_ref[...]

    # 2-class softmax in closed form: p0 = sigmoid(l0 - l1), p1 = 1 - p0.
    # No cross-sublane max/sum reductions; exp lands on the EUP; reciprocal
    # instead of a VPU divide; two direct lane-dense row stores (no concat).
    d = logits[0:1, :] - logits[1:2, :]                       # (1, TILE_B)
    p0 = pl.reciprocal(1.0 + jnp.exp(-d), approx=False)
    o_ref[0:1, :] = p0
    o_ref[1:2, :] = 1.0 - p0


@functools.partial(jax.jit, static_argnames=("tile_b",))
def predictor_forward(x, w1, b1, w2, b2, tile_b=_DEFAULT_TILE_B):
    """Forward pass of Predictor.

    Args:
      x : (B, 10) float32 input (natural PyTorch layout).
      w1: (10, 10) PyTorch linear1.weight (out, in).
      b1: (10,)    PyTorch linear1.bias.
      w2: (2, 10)  PyTorch linear2.weight (out, in).
      b2: (2,)     PyTorch linear2.bias.
    Returns:
      (B, 2) softmax probabilities.
    """
    B = x.shape[0]

    # --- batch-tile selection -------------------------------------------------
    # Lane axis = batch, so tiles are multiples of 128.  Prefer the largest tile
    # inside the VMEM budget, never (much) larger than the batch, and keep at
    # least 2 tiles when the batch allows it so dimension_semantics=("parallel",)
    # can spread tiles over both TensorCores on v7x megacore.
    tile_b = _round_up(max(int(tile_b), 128), 128)
    tile_b = min(tile_b, _MAX_TILE_B)
    tile_b = min(tile_b, _round_up(B, 128))
    if B > 128 and pl.cdiv(B, tile_b) < 2:
        tile_b = max(128, _round_up(pl.cdiv(B, 2), 128))
    n_tiles = pl.cdiv(B, tile_b)

    # No transpose / pad pass over x: it is consumed as-is by the kernel.
    x_f = x.astype(jnp.float32)
    w1f = w1.astype(jnp.float32)
    w2f = w2.astype(jnp.float32)
    b1c = b1.reshape(HID_F, 1).astype(jnp.float32)
    b2c = b2.reshape(OUT_F, 1).astype(jnp.float32)

    out_t = pl.pallas_call(
        predictor_kernel,
        out_shape=jax.ShapeDtypeStruct((OUT_F, B), jnp.float32),
        grid=(n_tiles,),
        in_specs=[
            pl.BlockSpec((tile_b, IN_F), lambda i: (i, 0)),   # x tile walks batch; ragged edge masked
            pl.BlockSpec((HID_F, IN_F), lambda i: (0, 0)),    # W1 VMEM-resident
            pl.BlockSpec((HID_F, 1), lambda i: (0, 0)),       # b1 resident
            pl.BlockSpec((OUT_F, HID_F), lambda i: (0, 0)),   # W2 resident
            pl.BlockSpec((OUT_F, 1), lambda i: (0, 0)),       # b2 resident
        ],
        out_specs=pl.BlockSpec((OUT_F, tile_b), lambda i: (0, i)),  # lane-dense (2, tile_b)
        compiler_params=pltpu.CompilerParams(
            dimension_semantics=("parallel",),   # shard batch tiles across TCs (v7x)
            vmem_limit_bytes=_VMEM_LIMIT_BYTES,
        ),
    )(x_f, w1f, b1c, w2f, b2c)

    # Module contract is (B, 2).  This tiny transpose (8 B/elem output) can be
    # dropped entirely if the consumer accepts the lane-dense (2, B) layout.
    return out_t.T


def init_params(key):
    # PyTorch nn.Linear default init: U(-1/sqrt(fan_in), 1/sqrt(fan_in)),
    # weights in PyTorch (out_features, in_features) layout.
    k1, k2, k3, k4 = jax.random.split(key, 4)
    bound1 = 1.0 / jnp.sqrt(float(IN_F))
    w1 = jax.random.uniform(k1, (HID_F, IN_F), jnp.float32, -bound1, bound1)
    b1 = jax.random.uniform(k2, (HID_F,), jnp.float32, -bound1, bound1)
    bound2 = 1.0 / jnp.sqrt(float(HID_F))
    w2 = jax.random.uniform(k3, (OUT_F, HID_F), jnp.float32, -bound2, bound2)
    b2 = jax.random.uniform(k4, (OUT_F,), jnp.float32, -bound2, bound2)
    return w1, b1, w2, b2


def reference_forward(x, w1, b1, w2, b2):
    hi = jax.lax.Precision.HIGHEST
    h = jnp.maximum(jnp.dot(x, w1.T, precision=hi) + b1, 0.0)
    logits = jnp.dot(h, w2.T, precision=hi) + b2
    return jax.nn.softmax(logits, axis=-1)


if __name__ == "__main__":
    key = jax.random.PRNGKey(0)
    k_params, k_x1, k_x2 = jax.random.split(key, 3)
    w1, b1, w2, b2 = init_params(k_params)

    # Tiny batch (matches the module spec): single partial tile, masked edges.
    x_small = jax.random.normal(k_x1, (8, IN_F), jnp.float32)
    out_small = jax.block_until_ready(predictor_forward(x_small, w1, b1, w2, b2))
    ref_small = reference_forward(x_small, w1, b1, w2, b2)
    assert out_small.shape == (8, OUT_F)
    assert jnp.allclose(out_small, ref_small, atol=1e-5, rtol=1e-5)
    assert jnp.allclose(jnp.sum(out_small, axis=-1), 1.0, atol=1e-5)

    # Batch not a multiple of the tile: multi-tile grid + ragged last block.
    x_big = jax.random.normal(k_x2, (300, IN_F), jnp.float32)
    out_big = jax.block_until_ready(
        predictor_forward(x_big, w1, b1, w2, b2, tile_b=128))
    ref_big = reference_forward(x_big, w1, b1, w2, b2)
    assert out_big.shape == (300, OUT_F)
    assert jnp.allclose(out_big, ref_big, atol=1e-5, rtol=1e-5)
    assert jnp.allclose(jnp.sum(out_big, axis=-1), 1.0, atol=1e-5)

    # Default (VMEM-budgeted) tile path with the megacore >=2-tile split.
    out_big2 = jax.block_until_ready(predictor_forward(x_big, w1, b1, w2, b2))
    assert jnp.allclose(out_big2, ref_big, atol=1e-5, rtol=1e-5)

    print("KERNEL_OK")
</pallas_src>

<mosaic_0001>
module attributes {stable_mosaic.version = 11 : i64} {
  func.func @predictor_kernel(%arg0: i32, %arg1: memref<128x10xf32, #tpu.memory_space<vmem>>, %arg2: memref<10x10xf32, #tpu.memory_space<vmem>>, %arg3: memref<10x1xf32, #tpu.memory_space<vmem>>, %arg4: memref<2x10xf32, #tpu.memory_space<vmem>>, %arg5: memref<2x1xf32, #tpu.memory_space<vmem>>, %arg6: memref<2x128xf32, #tpu.memory_space<vmem>>) attributes {dimension_semantics = [#tpu.dimension_semantics<parallel>], iteration_bounds = array<i64: 1>, scalar_prefetch = 0 : i64, scratch_operands = 0 : i64, tpu.core_type = #tpu.core_type<tc>, window_params = [{transform_indices = @transform_0, window_bounds = array<i64: 128, 10>}, {pipeline_mode = #tpu.pipeline_mode<synchronous>, transform_indices = @transform_1, window_bounds = array<i64: 10, 10>}, {pipeline_mode = #tpu.pipeline_mode<synchronous>, transform_indices = @transform_2, window_bounds = array<i64: 10, 1>}, {pipeline_mode = #tpu.pipeline_mode<synchronous>, transform_indices = @transform_3, window_bounds = array<i64: 2, 10>}, {pipeline_mode = #tpu.pipeline_mode<synchronous>, transform_indices = @transform_4, window_bounds = array<i64: 2, 1>}, {transform_indices = @transform_5, window_bounds = array<i64: 2, 128>}]} {
    %c0 = arith.constant 0 : index
    %c0_0 = arith.constant 0 : index
    %0 = vector.load %arg1[%c0, %c0_0] : memref<128x10xf32, #tpu.memory_space<vmem>>, vector<128x10xf32>
    %c0_1 = arith.constant 0 : index
    %c0_2 = arith.constant 0 : index
    %1 = vector.load %arg2[%c0_1, %c0_2] : memref<10x10xf32, #tpu.memory_space<vmem>>, vector<10x10xf32>
    %cst = arith.constant dense<0.000000e+00> : vector<10x128xf32>
    %2 = tpu.matmul %1, %0, %cst {dimension_numbers = #tpu.dot_dimension_numbers<[1], [1], [0], [0], [0, 0, 1, 0], [], []>, precision = #tpu.contract_precision<fp32>} : vector<10x10xf32>, vector<128x10xf32>, vector<10x128xf32> -> vector<10x128xf32>
    %c0_3 = arith.constant 0 : index
    %c0_4 = arith.constant 0 : index
    %3 = vector.load %arg3[%c0_3, %c0_4] : memref<10x1xf32, #tpu.memory_space<vmem>>, vector<10x1xf32>
    %4 = vector.broadcast %3 : vector<10x1xf32> to vector<10x128xf32>
    %5 = arith.addf %2, %4 : vector<10x128xf32>
    %cst_5 = arith.constant 0.000000e+00 : f32
    %6 = vector.broadcast %cst_5 : f32 to vector<10x128xf32>
    %7 = arith.maximumf %5, %6 : vector<10x128xf32>
    %c0_6 = arith.constant 0 : index
    %c0_7 = arith.constant 0 : index
    %8 = vector.load %arg4[%c0_6, %c0_7] : memref<2x10xf32, #tpu.memory_space<vmem>>, vector<2x10xf32>
    %cst_8 = arith.constant dense<0.000000e+00> : vector<2x128xf32>
    %9 = tpu.matmul %8, %7, %cst_8 {dimension_numbers = #tpu.dot_dimension_numbers<[1], [0], [0], [1], [0, 0, 1, 1], [], []>, precision = #tpu.contract_precision<fp32>} : vector<2x10xf32>, vector<10x128xf32>, vector<2x128xf32> -> vector<2x128xf32>
    %c0_9 = arith.constant 0 : index
    %c0_10 = arith.constant 0 : index
    %10 = vector.load %arg5[%c0_9, %c0_10] : memref<2x1xf32, #tpu.memory_space<vmem>>, vector<2x1xf32>
    %11 = vector.broadcast %10 : vector<2x1xf32> to vector<2x128xf32>
    %12 = arith.addf %9, %11 : vector<2x128xf32>
    %13 = vector.extract_strided_slice %12 {offsets = [0, 0], sizes = [1, 128], strides = [1, 1]} : vector<2x128xf32> to vector<1x128xf32>
    %14 = vector.extract_strided_slice %12 {offsets = [1, 0], sizes = [1, 128], strides = [1, 1]} : vector<2x128xf32> to vector<1x128xf32>
    %15 = arith.subf %13, %14 : vector<1x128xf32>
    %cst_11 = arith.constant 0.000000e+00 : f32
    %16 = vector.broadcast %cst_11 : f32 to vector<1x128xf32>
    %17 = arith.subf %16, %15 : vector<1x128xf32>
    %18 = math.exp %17 : vector<1x128xf32>
    %cst_12 = arith.constant 1.000000e+00 : f32
    %19 = vector.broadcast %cst_12 : f32 to vector<1x128xf32>
    %20 = arith.addf %19, %18 : vector<1x128xf32>
    %21 = tpu.reciprocal %20 : vector<1x128xf32> -> vector<1x128xf32>
    %c0_13 = arith.constant 0 : index
    %c0_14 = arith.constant 0 : index
    %22 = vector.load %arg6[%c0_13, %c0_14] : memref<2x128xf32, #tpu.memory_space<vmem>>, vector<1x128xf32>
    tpu.vector_store %arg6[%c0_13, %c0_14], %21 {strides = array<i32>} : memref<2x128xf32, #tpu.memory_space<vmem>>, vector<1x128xf32>,
    %cst_15 = arith.constant 1.000000e+00 : f32
    %23 = vector.broadcast %cst_15 : f32 to vector<1x128xf32>
    %24 = arith.subf %23, %21 : vector<1x128xf32>
    %c1 = arith.constant 1 : index
    %c0_16 = arith.constant 0 : index
    %25 = vector.load %arg6[%c1, %c0_16] : memref<2x128xf32, #tpu.memory_space<vmem>>, vector<1x128xf32>
    tpu.vector_store %arg6[%c1, %c0_16], %24 {strides = array<i32>} : memref<2x128xf32, #tpu.memory_space<vmem>>, vector<1x128xf32>,
    return
  }
  func.func @transform_0(%arg0: i32) -> (i32, i32) {
    %c0_i32 = arith.constant 0 : i32
    %c0_i32_0 = arith.constant 0 : i32
    return %arg0, %c0_i32 : i32, i32
  }
  func.func @transform_1(%arg0: i32) -> (i32, i32) {
    %c0_i32 = arith.constant 0 : i32
    %c0_i32_0 = arith.constant 0 : i32
    %c0_i32_1 = arith.constant 0 : i32
    return %c0_i32, %c0_i32_0 : i32, i32
  }
  func.func @transform_2(%arg0: i32) -> (i32, i32) {
    %c0_i32 = arith.constant 0 : i32
    %c0_i32_0 = arith.constant 0 : i32
    %c0_i32_1 = arith.constant 0 : i32
    return %c0_i32, %c0_i32_0 : i32, i32
  }
  func.func @transform_3(%arg0: i32) -> (i32, i32) {
    %c0_i32 = arith.constant 0 : i32
    %c0_i32_0 = arith.constant 0 : i32
    %c0_i32_1 = arith.constant 0 : i32
    return %c0_i32, %c0_i32_0 : i32, i32
  }
  func.func @transform_4(%arg0: i32) -> (i32, i32) {
    %c0_i32 = arith.constant 0 : i32
    %c0_i32_0 = arith.constant 0 : i32
    %c0_i32_1 = arith.constant 0 : i32
    return %c0_i32, %c0_i32_0 : i32, i32
  }
  func.func @transform_5(%arg0: i32) -> (i32, i32) {
    %c0_i32 = arith.constant 0 : i32
    %c0_i32_0 = arith.constant 0 : i32
    return %c0_i32, %arg0 : i32, i32
  }
}

</mosaic_0001>

<llo_original>
// kernel: predictor_forward.1
$region0: #{predictor_forward.1}
  #allocation0 [shape = 'u32[]', space=smem, size = 0x4, offset = 0x4, fixed_abs, tag = 'smem constant byte address 0x4 - core index']
  #allocation1 [shape = 'u32[144,128]{1,0:T(1,128)}', space=vmem, size = 0x12000, scoped, tag = 'internal scratch']
  %s0 = inlined_call_operand.vmem [shape: f32[8,10], index: 0, kind: input, shape index: {}]
  %s1 = inlined_call_operand.vmem [shape: f32[10,10], index: 1, kind: input, shape index: {}]
  %s2 = inlined_call_operand.vmem [shape: f32[10,1], index: 2, kind: input, shape index: {}]
  %s3 = inlined_call_operand.vmem [shape: f32[2,10], index: 3, kind: input, shape index: {}]
  %s4 = inlined_call_operand.vmem [shape: f32[2,1], index: 4, kind: input, shape index: {}]
  %s5 = inlined_call_operand.hbm [shape: f32[2,8], index: 5, kind: output, shape index: {}]
  %s6 = sld [smem:[#allocation0]]
  $region30: #{predictor_forward.1} parent=0
    _
  %s8 = ssub.s32 1, %s6
  %s9 = scalar_select 0, %s8, %s6
  $region1: #{predictor_forward.1} parent=0
    #allocation2 [shape = 'u8[1024]{0}', space=vmem, size = 0x400, scoped, tag = 'output window, operand 0, single buffered']
    #allocation3 [shape = 's32[1]{0}', space=sflag, size = 0x4, scoped, tag = 'scoped memory for predictor_forward.1']
    %10 = vsyncpa [#allocation3], 0
    // Predicated region
    $region2: #{predictor_forward.1} parent=1 // pred_check
      _
    $region3: #{predictor_forward.1} parent=1 // pred_check_branch
      %12 = sbr.rel (0) target = $region5
    $region4: #{predictor_forward.1} parent=1 // pred_region
      _
    $region5: #{predictor_forward.1} parent=1 // pred_fallthru
      _
    // Predicated region
    $region6: #{predictor_forward.1} parent=1 // pred_check
      _
    $region7: #{predictor_forward.1} parent=1 // pred_check_branch
      %14 = sbr.rel (0) target = $region9
    $region8: #{predictor_forward.1} parent=1 // pred_region
      _
    $region9: #{predictor_forward.1} parent=1 // pred_fallthru
      _
    // Predicated region
    $region10: #{predictor_forward.1} parent=1 // pred_check
      _
    $region11: #{predictor_forward.1} parent=1 // pred_check_branch
      %16 = sbr.rel (0) target = $region13
    $region12: #{predictor_forward.1} parent=1 // pred_region
      _
    $region13: #{predictor_forward.1} parent=1 // pred_fallthru
      _
    // Predicated region
    $region14: #{predictor_forward.1} parent=1 // pred_check
      _
    $region15: #{predictor_forward.1} parent=1 // pred_check_branch
      %18 = sbr.rel (0) target = $region17
    $region16: #{predictor_forward.1} parent=1 // pred_region
      _
    $region17: #{predictor_forward.1} parent=1 // pred_fallthru
      _
    // Predicated region
    $region18: #{predictor_forward.1} parent=1 // pred_check
      _
    $region19: #{predictor_forward.1} parent=1 // pred_check_branch
      %20 = sbr.rel (0) target = $region21
    $region20: #{predictor_forward.1} parent=1 // pred_region
      _
    $region21: #{predictor_forward.1} parent=1 // pred_fallthru
      _
    %v21 = vld [vmem:[%s0] sm:$0xff]
    %v22 = vld [vmem:[%s0 + $0x8] sm:$0xff]
    %v23 = vld [vmem:[%s0 + $0x10] sm:$0xff]
    %v24 = vld [vmem:[%s0 + $0x18] sm:$0xff]
    %v25 = vld [vmem:[%s0 + $0x20] sm:$0xff]
    %v26 = vld [vmem:[%s0 + $0x28] sm:$0xff]
    %v27 = vld [vmem:[%s0 + $0x30] sm:$0xff]
    %v28 = vld [vmem:[%s0 + $0x38] sm:$0xff]
    %v29 = vld [vmem:[%s0 + $0x40] sm:$0xff]
    %v30 = vld [vmem:[%s0 + $0x48] sm:$0xff]
    %v31 = vld [vmem:[%s0 + $0x50] sm:$0xff]
    %v32 = vld [vmem:[%s0 + $0x58] sm:$0xff]
    %v33 = vld [vmem:[%s0 + $0x60] sm:$0xff]
    %v34 = vld [vmem:[%s0 + $0x68] sm:$0xff]
    %v35 = vld [vmem:[%s0 + $0x70] sm:$0xff]
    %v36 = vld [vmem:[%s0 + $0x78] sm:$0xff]
    %v37 = vld [vmem:[%s1] sm:$0xff]
    %v38 = vld [vmem:[%s1 + $0x8] sm:$0x3]
    %v39 = vld [vmem:[%s2] sm:$0xff]
    %v40 = vld [vmem:[%s2 + $0x8] sm:$0x3]
    %42 = vset.pattern.permute.xlu0 0
    %43 = vperm.xlu0 %42, %v39
    %v44 = vpop.permute.xlu0 %43
    %47 = vset.pattern.permute.xlu0 0
    %48 = vperm.xlu0 %47, %v40
    %v49 = vpop.permute.xlu0 %48
    %vm51 = vcmask 80896
    %v53 = vsel %vm51, %v37, 0
    %v56 = vsel %vm51, %v38, 0
    %v59 = vsel %vm51, %v21, 0
    %v62 = vsel %vm51, %v22, 0
    %v65 = vsel %vm51, %v23, 0
    %v68 = vsel %vm51, %v24, 0
    %v71 = vsel %vm51, %v25, 0
    %v74 = vsel %vm51, %v26, 0
    %v77 = vsel %vm51, %v27, 0
    %v80 = vsel %vm51, %v28, 0
    %v83 = vsel %vm51, %v29, 0
    %v86 = vsel %vm51, %v30, 0
    %v89 = vsel %vm51, %v31, 0
    %v92 = vsel %vm51, %v32, 0
    %v95 = vsel %vm51, %v33, 0
    %v98 = vsel %vm51, %v34, 0
    %v101 = vsel %vm51, %v35, 0
    %v104 = vsel %vm51, %v36, 0
    %106 = vmatprep.subr.mxu0 0.0
    %v107 = vand.u32 %v104, 4294901760
    %108 = vmatpush1.xpose.msra.mxu0 %v107
    %109 = vmatprep.subr.mxu0 0.0
    %v110 = vand.u32 %v101, 4294901760
    %111 = vmatpush1.xpose.msra.mxu0 %v110
    %112 = vmatprep.subr.mxu0 0.0
    %v113 = vand.u32 %v98, 4294901760
    %114 = vmatpush1.xpose.msra.mxu0 %v113
    %115 = vmatprep.subr.mxu0 0.0
    %v116 = vand.u32 %v95, 4294901760
    %117 = vmatpush1.xpose.msra.mxu0 %v116
    %118 = vmatprep.subr.mxu0 0.0
    %v119 = vand.u32 %v92, 4294901760
    %120 = vmatpush1.xpose.msra.mxu0 %v119
    %121 = vmatprep.subr.mxu0 0.0
    %v122 = vand.u32 %v89, 4294901760
    %123 = vmatpush1.xpose.msra.mxu0 %v122
    %124 = vmatprep.subr.mxu0 0.0
    %v125 = vand.u32 %v86, 4294901760
    %126 = vmatpush1.xpose.msra.mxu0 %v125
    %127 = vmatprep.subr.mxu0 0.0
    %v128 = vand.u32 %v83, 4294901760
    %129 = vmatpush1.xpose.msra.mxu0 %v128
    %130 = vmatprep.subr.mxu0 0.0
    %v131 = vand.u32 %v80, 4294901760
    %132 = vmatpush1.xpose.msra.mxu0 %v131
    %133 = vmatprep.subr.mxu0 0.0
    %v134 = vand.u32 %v77, 4294901760
    %135 = vmatpush1.xpose.msra.mxu0 %v134
    %136 = vmatprep.subr.mxu0 0.0
    %v137 = vand.u32 %v74, 4294901760
    %138 = vmatpush1.xpose.msra.mxu0 %v137
    %139 = vmatprep.subr.mxu0 0.0
    %v140 = vand.u32 %v71, 4294901760
    %141 = vmatpush1.xpose.msra.mxu0 %v140
    %142 = vmatprep.subr.mxu0 0.0
    %v143 = vand.u32 %v68, 4294901760
    %144 = vmatpush1.xpose.msra.mxu0 %v143
    %145 = vmatprep.subr.mxu0 0.0
    %v146 = vand.u32 %v65, 4294901760
    %147 = vmatpush1.xpose.msra.mxu0 %v146
    %148 = vmatprep.subr.mxu0 0.0
    %v149 = vand.u32 %v62, 4294901760
    %150 = vmatpush1.xpose.msra.mxu0 %v149
    %151 = vmatprep.subr.mxu0 0.0
    %v152 = vand.u32 %v59, 4294901760
    %153 = vmatpush1.xpose.msra.mxu0 %v152
    %154 = vmatprep.subr.mxu0 0.0
    %155 = vmatpush2.xpose.msra.mxu0 0.0
    %156 = vmatprep.subr.mxu0 0.0
    %157 = vmatpush2.xpose.msra.mxu0 0.0
    %158 = vmatprep.subr.mxu0 0.0
    %159 = vmatpush2.xpose.msra.mxu0 0.0
    %160 = vmatprep.subr.mxu0 0.0
    %161 = vmatpush2.xpose.msra.mxu0 0.0
    %162 = vmatprep.subr.mxu0 0.0
    %163 = vmatpush2.xpose.msra.mxu0 0.0
    %164 = vmatprep.subr.mxu0 0.0
    %165 = vmatpush2.xpose.msra.mxu0 0.0
    %166 = vmatprep.subr.mxu0 0.0
    %167 = vmatpush2.xpose.msra.mxu0 0.0
    %168 = vmatprep.subr.mxu0 0.0
    %169 = vmatpush2.xpose.msra.mxu0 0.0
    %170 = vmatprep.subr.mxu0 0.0
    %171 = vmatpush2.xpose.msra.mxu0 0.0
    %172 = vmatprep.subr.mxu0 0.0
    %173 = vmatpush2.xpose.msra.mxu0 0.0
    %174 = vmatprep.subr.mxu0 0.0
    %175 = vmatpush2.xpose.msra.mxu0 0.0
    %176 = vmatprep.subr.mxu0 0.0
    %177 = vmatpush2.xpose.msra.mxu0 0.0
    %178 = vmatprep.subr.mxu0 0.0
    %179 = vmatpush2.xpose.msra.mxu0 0.0
    %180 = vmatprep.subr.mxu0 0.0
    %181 = vmatpush2.xpose.msra.mxu0 0.0
    %182 = vmatprep.subr.mxu0 0.0
    %183 = vmatpush2.xpose.msra.mxu0 0.0
    %184 = vmatprep.subr.mxu0 0.0
    %185 = vmatpush2.xpose.msra.mxu0 0.0
    %186 = vmatprep.mubr.f32.mxu0 0.0
    %v187 = vand.u32 %v53, 4294901760
    %v188 = vsub.f32 %v53, %v187
    %v189 = vand.u32 %v188, 4294901760
    %v190 = vsub.f32 %v188, %v189
    %v191 = vand.u32 %v190, 4294901760
    %192 = vmatmul.mubr.f32.gmra.mxu0 %v191
    %v193 = vpop.f32.mrf.mxu0
    %v194 = vadd.f32 %v44, %v193
    %v195 = vpop.f32.mrf.mxu0
    %196 = vmatprep.mubr.f32.mxu0 0.0
    %v197 = vand.u32 %v56, 4294901760
    %v198 = vsub.f32 %v56, %v197
    %v199 = vand.u32 %v198, 4294901760
    %v200 = vsub.f32 %v198, %v199
    %v201 = vand.u32 %v200, 4294901760
    %202 = vmatmul.mubr.f32.gmra.mxu0 %v201
    %v203 = vpop.f32.mrf.mxu0
    %v204 = vadd.f32 %v49, %v203
    %v205 = vpop.f32.mrf.mxu0
    %206 = vdwg.mxu0
    %207 = vmatprep.subr.mxu0 0.0
    %v208 = vand.u32 %v104, 4294901760
    %v209 = vsub.f32 %v104, %v208
    %v210 = vand.u32 %v209, 4294901760
    %v211 = vsub.f32 %v209, %v210
    %v212 = vand.u32 %v211, 4294901760
    %213 = vmatpush1.xpose.msra.mxu0 %v212
    %214 = vmatprep.subr.mxu0 0.0
    %v215 = vand.u32 %v101, 4294901760
    %v216 = vsub.f32 %v101, %v215
    %v217 = vand.u32 %v216, 4294901760
    %v218 = vsub.f32 %v216, %v217
    %v219 = vand.u32 %v218, 4294901760
    %220 = vmatpush1.xpose.msra.mxu0 %v219
    %221 = vmatprep.subr.mxu0 0.0
    %v222 = vand.u32 %v98, 4294901760
    %v223 = vsub.f32 %v98, %v222
    %v224 = vand.u32 %v223, 4294901760
    %v225 = vsub.f32 %v223, %v224
    %v226 = vand.u32 %v225, 4294901760
    %227 = vmatpush1.xpose.msra.mxu0 %v226
    %228 = vmatprep.subr.mxu0 0.0
    %v229 = vand.u32 %v95, 4294901760
    %v230 = vsub.f32 %v95, %v229
    %v231 = vand.u32 %v230, 4294901760
    %v232 = vsub.f32 %v230, %v231
    %v233 = vand.u32 %v232, 4294901760
    %234 = vmatpush1.xpose.msra.mxu0 %v233
    %235 = vmatprep.subr.mxu0 0.0
    %v236 = vand.u32 %v92, 4294901760
    %v237 = vsub.f32 %v92, %v236
    %v238 = vand.u32 %v237, 4294901760
    %v239 = vsub.f32 %v237, %v238
    %v240 = vand.u32 %v239, 4294901760
    %241 = vmatpush1.xpose.msra.mxu0 %v240
    %242 = vmatprep.subr.mxu0 0.0
    %v243 = vand.u32 %v89, 4294901760
    %v244 = vsub.f32 %v89, %v243
    %v245 = vand.u32 %v244, 4294901760
    %v246 = vsub.f32 %v244, %v245
    %v247 = vand.u32 %v246, 4294901760
    %248 = vmatpush1.xpose.msra.mxu0 %v247
    %249 = vmatprep.subr.mxu0 0.0
    %v250 = vand.u32 %v86, 4294901760
    %v251 = vsub.f32 %v86, %v250
    %v252 = vand.u32 %v251, 4294901760
    %v253 = vsub.f32 %v251, %v252
    %v254 = vand.u32 %v253, 4294901760
    %255 = vmatpush1.xpose.msra.mxu0 %v254
    %256 = vmatprep.subr.mxu0 0.0
    %v257 = vand.u32 %v83, 4294901760
    %v258 = vsub.f32 %v83, %v257
    %v259 = vand.u32 %v258, 4294901760
    %v260 = vsub.f32 %v258, %v259
    %v261 = vand.u32 %v260, 4294901760
    %262 = vmatpush1.xpose.msra.mxu0 %v261
    %263 = vmatprep.subr.mxu0 0.0
    %v264 = vand.u32 %v80, 4294901760
    %v265 = vsub.f32 %v80, %v264
    %v266 = vand.u32 %v265, 4294901760
    %v267 = vsub.f32 %v265, %v266
    %v268 = vand.u32 %v267, 4294901760
    %269 = vmatpush1.xpose.msra.mxu0 %v268
    %270 = vmatprep.subr.mxu0 0.0
    %v271 = vand.u32 %v77, 4294901760
    %v272 = vsub.f32 %v77, %v271
    %v273 = vand.u32 %v272, 4294901760
    %v274 = vsub.f32 %v272, %v273
    %v275 = vand.u32 %v274, 4294901760
    %276 = vmatpush1.xpose.msra.mxu0 %v275
    %277 = vmatprep.subr.mxu0 0.0
    %v278 = vand.u32 %v74, 4294901760
    %v279 = vsub.f32 %v74, %v278
    %v280 = vand.u32 %v279, 4294901760
    %v281 = vsub.f32 %v279, %v280
    %v282 = vand.u32 %v281, 4294901760
    %283 = vmatpush1.xpose.msra.mxu0 %v282
    %284 = vmatprep.subr.mxu0 0.0
    %v285 = vand.u32 %v71, 4294901760
    %v286 = vsub.f32 %v71, %v285
    %v287 = vand.u32 %v286, 4294901760
    %v288 = vsub.f32 %v286, %v287
    %v289 = vand.u32 %v288, 4294901760
    %290 = vmatpush1.xpose.msra.mxu0 %v289
    %291 = vmatprep.subr.mxu0 0.0
    %v292 = vand.u32 %v68, 4294901760
    %v293 = vsub.f32 %v68, %v292
    %v294 = vand.u32 %v293, 4294901760
    %v295 = vsub.f32 %v293, %v294
    %v296 = vand.u32 %v295, 4294901760
    %297 = vmatpush1.xpose.msra.mxu0 %v296
    %298 = vmatprep.subr.mxu0 0.0
    %v299 = vand.u32 %v65, 4294901760
    %v300 = vsub.f32 %v65, %v299
    %v301 = vand.u32 %v300, 4294901760
    %v302 = vsub.f32 %v300, %v301
    %v303 = vand.u32 %v302, 4294901760
    %304 = vmatpush1.xpose.msra.mxu0 %v303
    %305 = vmatprep.subr.mxu0 0.0
    %v306 = vand.u32 %v62, 4294901760
    %v307 = vsub.f32 %v62, %v306
    %v308 = vand.u32 %v307, 4294901760
    %v309 = vsub.f32 %v307, %v308
    %v310 = vand.u32 %v309, 4294901760
    %311 = vmatpush1.xpose.msra.mxu0 %v310
    %312 = vmatprep.subr.mxu0 0.0
    %v313 = vand.u32 %v59, 4294901760
    %v314 = vsub.f32 %v59, %v313
    %v315 = vand.u32 %v314, 4294901760
    %v316 = vsub.f32 %v314, %v315
    %v317 = vand.u32 %v316, 4294901760
    %318 = vmatpush1.xpose.msra.mxu0 %v317
    %319 = vmatprep.subr.mxu0 0.0
    %320 = vmatpush2.xpose.msra.mxu0 0.0
    %321 = vmatprep.subr.mxu0 0.0
    %322 = vmatpush2.xpose.msra.mxu0 0.0
    %323 = vmatprep.subr.mxu0 0.0
    %324 = vmatpush2.xpose.msra.mxu0 0.0
    %325 = vmatprep.subr.mxu0 0.0
    %326 = vmatpush2.xpose.msra.mxu0 0.0
    %327 = vmatprep.subr.mxu0 0.0
    %328 = vmatpush2.xpose.msra.mxu0 0.0
    %329 = vmatprep.subr.mxu0 0.0
    %330 = vmatpush2.xpose.msra.mxu0 0.0
    %331 = vmatprep.subr.mxu0 0.0
    %332 = vmatpush2.xpose.msra.mxu0 0.0
    %333 = vmatprep.subr.mxu0 0.0
    %334 = vmatpush2.xpose.msra.mxu0 0.0
    %335 = vmatprep.subr.mxu0 0.0
    %336 = vmatpush2.xpose.msra.mxu0 0.0
    %337 = vmatprep.subr.mxu0 0.0
    %338 = vmatpush2.xpose.msra.mxu0 0.0
    %339 = vmatprep.subr.mxu0 0.0
    %340 = vmatpush2.xpose.msra.mxu0 0.0
    %341 = vmatprep.subr.mxu0 0.0
    %342 = vmatpush2.xpose.msra.mxu0 0.0
    %343 = vmatprep.subr.mxu0 0.0
    %344 = vmatpush2.xpose.msra.mxu0 0.0
    %345 = vmatprep.subr.mxu0 0.0
    %346 = vmatpush2.xpose.msra.mxu0 0.0
    %347 = vmatprep.subr.mxu0 0.0
    %348 = vmatpush2.xpose.msra.mxu0 0.0
    %349 = vmatprep.subr.mxu0 0.0
    %350 = vmatpush2.xpose.msra.mxu0 0.0
    %351 = vmatprep.mubr.f32.mxu0 0.0
    %v352 = vand.u32 %v53, 4294901760
    %353 = vmatmul.mubr.f32.gmra.mxu0 %v352
    %v354 = vpop.f32.mrf.mxu0
    %v355 = vadd.f32 %v194, %v354
    %v356 = vpop.f32.mrf.mxu0
    %357 = vmatprep.mubr.f32.mxu0 0.0
    %v358 = vand.u32 %v56, 4294901760
    %359 = vmatmul.mubr.f32.gmra.mxu0 %v358
    %v360 = vpop.f32.mrf.mxu0
    %v361 = vadd.f32 %v204, %v360
    %v362 = vpop.f32.mrf.mxu0
    %363 = vdwg.mxu0
    %364 = vmatprep.subr.mxu0 0.0
    %v365 = vand.u32 %v104, 4294901760
    %v366 = vsub.f32 %v104, %v365
    %367 = vmatpush1.xpose.msra.mxu0 %v366
    %368 = vmatprep.subr.mxu0 0.0
    %v369 = vand.u32 %v101, 4294901760
    %v370 = vsub.f32 %v101, %v369
    %371 = vmatpush1.xpose.msra.mxu0 %v370
    %372 = vmatprep.subr.mxu0 0.0
    %v373 = vand.u32 %v98, 4294901760
    %v374 = vsub.f32 %v98, %v373
    %375 = vmatpush1.xpose.msra.mxu0 %v374
    %376 = vmatprep.subr.mxu0 0.0
    %v377 = vand.u32 %v95, 4294901760
    %v378 = vsub.f32 %v95, %v377
    %379 = vmatpush1.xpose.msra.mxu0 %v378
    %380 = vmatprep.subr.mxu0 0.0
    %v381 = vand.u32 %v92, 4294901760
    %v382 = vsub.f32 %v92, %v381
    %383 = vmatpush1.xpose.msra.mxu0 %v382
    %384 = vmatprep.subr.mxu0 0.0
    %v385 = vand.u32 %v89, 4294901760
    %v386 = vsub.f32 %v89, %v385
    %387 = vmatpush1.xpose.msra.mxu0 %v386
    %388 = vmatprep.subr.mxu0 0.0
    %v389 = vand.u32 %v86, 4294901760
    %v390 = vsub.f32 %v86, %v389
    %391 = vmatpush1.xpose.msra.mxu0 %v390
    %392 = vmatprep.subr.mxu0 0.0
    %v393 = vand.u32 %v83, 4294901760
    %v394 = vsub.f32 %v83, %v393
    %395 = vmatpush1.xpose.msra.mxu0 %v394
    %396 = vmatprep.subr.mxu0 0.0
    %v397 = vand.u32 %v80, 4294901760
    %v398 = vsub.f32 %v80, %v397
    %399 = vmatpush1.xpose.msra.mxu0 %v398
    %400 = vmatprep.subr.mxu0 0.0
    %v401 = vand.u32 %v77, 4294901760
    %v402 = vsub.f32 %v77, %v401
    %403 = vmatpush1.xpose.msra.mxu0 %v402
    %404 = vmatprep.subr.mxu0 0.0
    %v405 = vand.u32 %v74, 4294901760
    %v406 = vsub.f32 %v74, %v405
    %407 = vmatpush1.xpose.msra.mxu0 %v406
    %408 = vmatprep.subr.mxu0 0.0
    %v409 = vand.u32 %v71, 4294901760
    %v410 = vsub.f32 %v71, %v409
    %411 = vmatpush1.xpose.msra.mxu0 %v410
    %412 = vmatprep.subr.mxu0 0.0
    %v413 = vand.u32 %v68, 4294901760
    %v414 = vsub.f32 %v68, %v413
    %415 = vmatpush1.xpose.msra.mxu0 %v414
    %416 = vmatprep.subr.mxu0 0.0
    %v417 = vand.u32 %v65, 4294901760
    %v418 = vsub.f32 %v65, %v417
    %419 = vmatpush1.xpose.msra.mxu0 %v418
    %420 = vmatprep.subr.mxu0 0.0
    %v421 = vand.u32 %v62, 4294901760
    %v422 = vsub.f32 %v62, %v421
    %423 = vmatpush1.xpose.msra.mxu0 %v422
    %424 = vmatprep.subr.mxu0 0.0
    %v425 = vand.u32 %v59, 4294901760
    %v426 = vsub.f32 %v59, %v425
    %427 = vmatpush1.xpose.msra.mxu0 %v426
    %428 = vmatprep.subr.mxu0 0.0
    %429 = vmatpush2.xpose.msra.mxu0 0.0
    %430 = vmatprep.subr.mxu0 0.0
    %431 = vmatpush2.xpose.msra.mxu0 0.0
    %432 = vmatprep.subr.mxu0 0.0
    %433 = vmatpush2.xpose.msra.mxu0 0.0
    %434 = vmatprep.subr.mxu0 0.0
    %435 = vmatpush2.xpose.msra.mxu0 0.0
    %436 = vmatprep.subr.mxu0 0.0
    %437 = vmatpush2.xpose.msra.mxu0 0.0
    %438 = vmatprep.subr.mxu0 0.0
    %439 = vmatpush2.xpose.msra.mxu0 0.0
    %440 = vmatprep.subr.mxu0 0.0
    %441 = vmatpush2.xpose.msra.mxu0 0.0
    %442 = vmatprep.subr.mxu0 0.0
    %443 = vmatpush2.xpose.msra.mxu0 0.0
    %444 = vmatprep.subr.mxu0 0.0
    %445 = vmatpush2.xpose.msra.mxu0 0.0
    %446 = vmatprep.subr.mxu0 0.0
    %447 = vmatpush2.xpose.msra.mxu0 0.0
    %448 = vmatprep.subr.mxu0 0.0
    %449 = vmatpush2.xpose.msra.mxu0 0.0
    %450 = vmatprep.subr.mxu0 0.0
    %451 = vmatpush2.xpose.msra.mxu0 0.0
    %452 = vmatprep.subr.mxu0 0.0
    %453 = vmatpush2.xpose.msra.mxu0 0.0
    %454 = vmatprep.subr.mxu0 0.0
    %455 = vmatpush2.xpose.msra.mxu0 0.0
    %456 = vmatprep.subr.mxu0 0.0
    %457 = vmatpush2.xpose.msra.mxu0 0.0
    %458 = vmatprep.subr.mxu0 0.0
    %459 = vmatpush2.xpose.msra.mxu0 0.0
    %460 = vmatprep.mubr.f32.mxu0 0.0
    %v461 = vand.u32 %v53, 4294901760
    %v462 = vsub.f32 %v53, %v461
    %463 = vmatmul.mubr.f32.gmra.mxu0 %v462
    %v464 = vpop.f32.mrf.mxu0
    %v465 = vadd.f32 %v355, %v464
    %v466 = vpop.f32.mrf.mxu0
    %467 = vmatprep.mubr.f32.mxu0 0.0
    %v468 = vand.u32 %v56, 4294901760
    %v469 = vsub.f32 %v56, %v468
    %470 = vmatmul.mubr.f32.gmra.mxu0 %v469
    %v471 = vpop.f32.mrf.mxu0
    %v472 = vadd.f32 %v361, %v471
    %v473 = vpop.f32.mrf.mxu0
    %474 = vdwg.mxu0
    %475 = vmatprep.subr.mxu0 0.0
    %v476 = vand.u32 %v104, 4294901760
    %477 = vmatpush1.xpose.msra.mxu0 %v476
    %478 = vmatprep.subr.mxu0 0.0
    %v479 = vand.u32 %v101, 4294901760
    %480 = vmatpush1.xpose.msra.mxu0 %v479
    %481 = vmatprep.subr.mxu0 0.0
    %v482 = vand.u32 %v98, 4294901760
    %483 = vmatpush1.xpose.msra.mxu0 %v482
    %484 = vmatprep.subr.mxu0 0.0
    %v485 = vand.u32 %v95, 4294901760
    %486 = vmatpush1.xpose.msra.mxu0 %v485
    %487 = vmatprep.subr.mxu0 0.0
    %v488 = vand.u32 %v92, 4294901760
    %489 = vmatpush1.xpose.msra.mxu0 %v488
    %490 = vmatprep.subr.mxu0 0.0
    %v491 = vand.u32 %v89, 4294901760
    %492 = vmatpush1.xpose.msra.mxu0 %v491
    %493 = vmatprep.subr.mxu0 0.0
    %v494 = vand.u32 %v86, 4294901760
    %495 = vmatpush1.xpose.msra.mxu0 %v494
    %496 = vmatprep.subr.mxu0 0.0
    %v497 = vand.u32 %v83, 4294901760
    %498 = vmatpush1.xpose.msra.mxu0 %v497
    %499 = vmatprep.subr.mxu0 0.0
    %v500 = vand.u32 %v80, 4294901760
    %501 = vmatpush1.xpose.msra.mxu0 %v500
    %502 = vmatprep.subr.mxu0 0.0
    %v503 = vand.u32 %v77, 4294901760
    %504 = vmatpush1.xpose.msra.mxu0 %v503
    %505 = vmatprep.subr.mxu0 0.0
    %v506 = vand.u32 %v74, 4294901760
    %507 = vmatpush1.xpose.msra.mxu0 %v506
    %508 = vmatprep.subr.mxu0 0.0
    %v509 = vand.u32 %v71, 4294901760
    %510 = vmatpush1.xpose.msra.mxu0 %v509
    %511 = vmatprep.subr.mxu0 0.0
    %v512 = vand.u32 %v68, 4294901760
    %513 = vmatpush1.xpose.msra.mxu0 %v512
    %514 = vmatprep.subr.mxu0 0.0
    %v515 = vand.u32 %v65, 4294901760
    %516 = vmatpush1.xpose.msra.mxu0 %v515
    %517 = vmatprep.subr.mxu0 0.0
    %v518 = vand.u32 %v62, 4294901760
    %519 = vmatpush1.xpose.msra.mxu0 %v518
    %520 = vmatprep.subr.mxu0 0.0
    %v521 = vand.u32 %v59, 4294901760
    %522 = vmatpush1.xpose.msra.mxu0 %v521
    %523 = vmatprep.subr.mxu0 0.0
    %524 = vmatpush2.xpose.msra.mxu0 0.0
    %525 = vmatprep.subr.mxu0 0.0
    %526 = vmatpush2.xpose.msra.mxu0 0.0
    %527 = vmatprep.subr.mxu0 0.0
    %528 = vmatpush2.xpose.msra.mxu0 0.0
    %529 = vmatprep.subr.mxu0 0.0
    %530 = vmatpush2.xpose.msra.mxu0 0.0
    %531 = vmatprep.subr.mxu0 0.0
    %532 = vmatpush2.xpose.msra.mxu0 0.0
    %533 = vmatprep.subr.mxu0 0.0
    %534 = vmatpush2.xpose.msra.mxu0 0.0
    %535 = vmatprep.subr.mxu0 0.0
    %536 = vmatpush2.xpose.msra.mxu0 0.0
    %537 = vmatprep.subr.mxu0 0.0
    %538 = vmatpush2.xpose.msra.mxu0 0.0
    %539 = vmatprep.subr.mxu0 0.0
    %540 = vmatpush2.xpose.msra.mxu0 0.0
    %541 = vmatprep.subr.mxu0 0.0
    %542 = vmatpush2.xpose.msra.mxu0 0.0
    %543 = vmatprep.subr.mxu0 0.0
    %544 = vmatpush2.xpose.msra.mxu0 0.0
    %545 = vmatprep.subr.mxu0 0.0
    %546 = vmatpush2.xpose.msra.mxu0 0.0
    %547 = vmatprep.subr.mxu0 0.0
    %548 = vmatpush2.xpose.msra.mxu0 0.0
    %549 = vmatprep.subr.mxu0 0.0
    %550 = vmatpush2.xpose.msra.mxu0 0.0
    %551 = vmatprep.subr.mxu0 0.0
    %552 = vmatpush2.xpose.msra.mxu0 0.0
    %553 = vmatprep.subr.mxu0 0.0
    %554 = vmatpush2.xpose.msra.mxu0 0.0
    %555 = vmatprep.mubr.f32.mxu0 0.0
    %v556 = vand.u32 %v53, 4294901760
    %v557 = vsub.f32 %v53, %v556
    %v558 = vand.u32 %v557, 4294901760
    %559 = vmatmul.mubr.f32.gmra.mxu0 %v558
    %v560 = vpop.f32.mrf.mxu0
    %v561 = vadd.f32 %v465, %v560
    %v562 = vpop.f32.mrf.mxu0
    %563 = vmatprep.mubr.f32.mxu0 0.0
    %v564 = vand.u32 %v56, 4294901760
    %v565 = vsub.f32 %v56, %v564
    %v566 = vand.u32 %v565, 4294901760
    %567 = vmatmul.mubr.f32.gmra.mxu0 %v566
    %v568 = vpop.f32.mrf.mxu0
    %v569 = vadd.f32 %v472, %v568
    %v570 = vpop.f32.mrf.mxu0
    %571 = vdwg.mxu0
    %572 = vmatprep.subr.mxu0 0.0
    %v573 = vand.u32 %v104, 4294901760
    %v574 = vsub.f32 %v104, %v573
    %v575 = vand.u32 %v574, 4294901760
    %576 = vmatpush1.xpose.msra.mxu0 %v575
    %577 = vmatprep.subr.mxu0 0.0
    %v578 = vand.u32 %v101, 4294901760
    %v579 = vsub.f32 %v101, %v578
    %v580 = vand.u32 %v579, 4294901760
    %581 = vmatpush1.xpose.msra.mxu0 %v580
    %582 = vmatprep.subr.mxu0 0.0
    %v583 = vand.u32 %v98, 4294901760
    %v584 = vsub.f32 %v98, %v583
    %v585 = vand.u32 %v584, 4294901760
    %586 = vmatpush1.xpose.msra.mxu0 %v585
    %587 = vmatprep.subr.mxu0 0.0
    %v588 = vand.u32 %v95, 4294901760
    %v589 = vsub.f32 %v95, %v588
    %v590 = vand.u32 %v589, 4294901760
    %591 = vmatpush1.xpose.msra.mxu0 %v590
    %592 = vmatprep.subr.mxu0 0.0
    %v593 = vand.u32 %v92, 4294901760
    %v594 = vsub.f32 %v92, %v593
    %v595 = vand.u32 %v594, 4294901760
    %596 = vmatpush1.xpose.msra.mxu0 %v595
    %597 = vmatprep.subr.mxu0 0.0
    %v598 = vand.u32 %v89, 4294901760
    %v599 = vsub.f32 %v89, %v598
    %v600 = vand.u32 %v599, 4294901760
    %601 = vmatpush1.xpose.msra.mxu0 %v600
    %602 = vmatprep.subr.mxu0 0.0
    %v603 = vand.u32 %v86, 4294901760
    %v604 = vsub.f32 %v86, %v603
    %v605 = vand.u32 %v604, 4294901760
    %606 = vmatpush1.xpose.msra.mxu0 %v605
    %607 = vmatprep.subr.mxu0 0.0
    %v608 = vand.u32 %v83, 4294901760
    %v609 = vsub.f32 %v83, %v608
    %v610 = vand.u32 %v609, 4294901760
    %611 = vmatpush1.xpose.msra.mxu0 %v610
    %612 = vmatprep.subr.mxu0 0.0
    %v613 = vand.u32 %v80, 4294901760
    %v614 = vsub.f32 %v80, %v613
    %v615 = vand.u32 %v614, 4294901760
    %616 = vmatpush1.xpose.msra.mxu0 %v615
    %617 = vmatprep.subr.mxu0 0.0
    %v618 = vand.u32 %v77, 4294901760
    %v619 = vsub.f32 %v77, %v618
    %v620 = vand.u32 %v619, 4294901760
    %621 = vmatpush1.xpose.msra.mxu0 %v620
    %622 = vmatprep.subr.mxu0 0.0
    %v623 = vand.u32 %v74, 4294901760
    %v624 = vsub.f32 %v74, %v623
    %v625 = vand.u32 %v624, 4294901760
    %626 = vmatpush1.xpose.msra.mxu0 %v625
    %627 = vmatprep.subr.mxu0 0.0
    %v628 = vand.u32 %v71, 4294901760
    %v629 = vsub.f32 %v71, %v628
    %v630 = vand.u32 %v629, 4294901760
    %631 = vmatpush1.xpose.msra.mxu0 %v630
    %632 = vmatprep.subr.mxu0 0.0
    %v633 = vand.u32 %v68, 4294901760
    %v634 = vsub.f32 %v68, %v633
    %v635 = vand.u32 %v634, 4294901760
    %636 = vmatpush1.xpose.msra.mxu0 %v635
    %637 = vmatprep.subr.mxu0 0.0
    %v638 = vand.u32 %v65, 4294901760
    %v639 = vsub.f32 %v65, %v638
    %v640 = vand.u32 %v639, 4294901760
    %641 = vmatpush1.xpose.msra.mxu0 %v640
    %642 = vmatprep.subr.mxu0 0.0
    %v643 = vand.u32 %v62, 4294901760
    %v644 = vsub.f32 %v62, %v643
    %v645 = vand.u32 %v644, 4294901760
    %646 = vmatpush1.xpose.msra.mxu0 %v645
    %647 = vmatprep.subr.mxu0 0.0
    %v648 = vand.u32 %v59, 4294901760
    %v649 = vsub.f32 %v59, %v648
    %v650 = vand.u32 %v649, 4294901760
    %651 = vmatpush1.xpose.msra.mxu0 %v650
    %652 = vmatprep.subr.mxu0 0.0
    %653 = vmatpush2.xpose.msra.mxu0 0.0
    %654 = vmatprep.subr.mxu0 0.0
    %655 = vmatpush2.xpose.msra.mxu0 0.0
    %656 = vmatprep.subr.mxu0 0.0
    %657 = vmatpush2.xpose.msra.mxu0 0.0
    %658 = vmatprep.subr.mxu0 0.0
    %659 = vmatpush2.xpose.msra.mxu0 0.0
    %660 = vmatprep.subr.mxu0 0.0
    %661 = vmatpush2.xpose.msra.mxu0 0.0
    %662 = vmatprep.subr.mxu0 0.0
    %663 = vmatpush2.xpose.msra.mxu0 0.0
    %664 = vmatprep.subr.mxu0 0.0
    %665 = vmatpush2.xpose.msra.mxu0 0.0
    %666 = vmatprep.subr.mxu0 0.0
    %667 = vmatpush2.xpose.msra.mxu0 0.0
    %668 = vmatprep.subr.mxu0 0.0
    %669 = vmatpush2.xpose.msra.mxu0 0.0
    %670 = vmatprep.subr.mxu0 0.0
    %671 = vmatpush2.xpose.msra.mxu0 0.0
    %672 = vmatprep.subr.mxu0 0.0
    %673 = vmatpush2.xpose.msra.mxu0 0.0
    %674 = vmatprep.subr.mxu0 0.0
    %675 = vmatpush2.xpose.msra.mxu0 0.0
    %676 = vmatprep.subr.mxu0 0.0
    %677 = vmatpush2.xpose.msra.mxu0 0.0
    %678 = vmatprep.subr.mxu0 0.0
    %679 = vmatpush2.xpose.msra.mxu0 0.0
    %680 = vmatprep.subr.mxu0 0.0
    %681 = vmatpush2.xpose.msra.mxu0 0.0
    %682 = vmatprep.subr.mxu0 0.0
    %683 = vmatpush2.xpose.msra.mxu0 0.0
    %684 = vmatprep.mubr.f32.mxu0 0.0
    %v685 = vand.u32 %v53, 4294901760
    %686 = vmatmul.mubr.f32.gmra.mxu0 %v685
    %v687 = vpop.f32.mrf.mxu0
    %v688 = vadd.f32 %v561, %v687
    %v689 = vpop.f32.mrf.mxu0
    %690 = vmatprep.mubr.f32.mxu0 0.0
    %v691 = vand.u32 %v56, 4294901760
    %692 = vmatmul.mubr.f32.gmra.mxu0 %v691
    %v693 = vpop.f32.mrf.mxu0
    %v694 = vadd.f32 %v569, %v693
    %v695 = vpop.f32.mrf.mxu0
    %696 = vdwg.mxu0
    %697 = vmatprep.subr.mxu0 0.0
    %v698 = vand.u32 %v104, 4294901760
    %699 = vmatpush1.xpose.msra.mxu0 %v698
    %700 = vmatprep.subr.mxu0 0.0
    %v701 = vand.u32 %v101, 4294901760
    %702 = vmatpush1.xpose.msra.mxu0 %v701
    %703 = vmatprep.subr.mxu0 0.0
    %v704 = vand.u32 %v98, 4294901760
    %705 = vmatpush1.xpose.msra.mxu0 %v704
    %706 = vmatprep.subr.mxu0 0.0
    %v707 = vand.u32 %v95, 4294901760
    %708 = vmatpush1.xpose.msra.mxu0 %v707
    %709 = vmatprep.subr.mxu0 0.0
    %v710 = vand.u32 %v92, 4294901760
    %711 = vmatpush1.xpose.msra.mxu0 %v710
    %712 = vmatprep.subr.mxu0 0.0
    %v713 = vand.u32 %v89, 4294901760
    %714 = vmatpush1.xpose.msra.mxu0 %v713
    %715 = vmatprep.subr.mxu0 0.0
    %v716 = vand.u32 %v86, 4294901760
    %717 = vmatpush1.xpose.msra.mxu0 %v716
    %718 = vmatprep.subr.mxu0 0.0
    %v719 = vand.u32 %v83, 4294901760
    %720 = vmatpush1.xpose.msra.mxu0 %v719
    %721 = vmatprep.subr.mxu0 0.0
    %v722 = vand.u32 %v80, 4294901760
    %723 = vmatpush1.xpose.msra.mxu0 %v722
    %724 = vmatprep.subr.mxu0 0.0
    %v725 = vand.u32 %v77, 4294901760
    %726 = vmatpush1.xpose.msra.mxu0 %v725
    %727 = vmatprep.subr.mxu0 0.0
    %v728 = vand.u32 %v74, 4294901760
    %729 = vmatpush1.xpose.msra.mxu0 %v728
    %730 = vmatprep.subr.mxu0 0.0
    %v731 = vand.u32 %v71, 4294901760
    %732 = vmatpush1.xpose.msra.mxu0 %v731
    %733 = vmatprep.subr.mxu0 0.0
    %v734 = vand.u32 %v68, 4294901760
    %735 = vmatpush1.xpose.msra.mxu0 %v734
    %736 = vmatprep.subr.mxu0 0.0
    %v737 = vand.u32 %v65, 4294901760
    %738 = vmatpush1.xpose.msra.mxu0 %v737
    %739 = vmatprep.subr.mxu0 0.0
    %v740 = vand.u32 %v62, 4294901760
    %741 = vmatpush1.xpose.msra.mxu0 %v740
    %742 = vmatprep.subr.mxu0 0.0
    %v743 = vand.u32 %v59, 4294901760
    %744 = vmatpush1.xpose.msra.mxu0 %v743
    %745 = vmatprep.subr.mxu0 0.0
    %746 = vmatpush2.xpose.msra.mxu0 0.0
    %747 = vmatprep.subr.mxu0 0.0
    %748 = vmatpush2.xpose.msra.mxu0 0.0
    %749 = vmatprep.subr.mxu0 0.0
    %750 = vmatpush2.xpose.msra.mxu0 0.0
    %751 = vmatprep.subr.mxu0 0.0
    %752 = vmatpush2.xpose.msra.mxu0 0.0
    %753 = vmatprep.subr.mxu0 0.0
    %754 = vmatpush2.xpose.msra.mxu0 0.0
    %755 = vmatprep.subr.mxu0 0.0
    %756 = vmatpush2.xpose.msra.mxu0 0.0
    %757 = vmatprep.subr.mxu0 0.0
    %758 = vmatpush2.xpose.msra.mxu0 0.0
    %759 = vmatprep.subr.mxu0 0.0
    %760 = vmatpush2.xpose.msra.mxu0 0.0
    %761 = vmatprep.subr.mxu0 0.0
    %762 = vmatpush2.xpose.msra.mxu0 0.0
    %763 = vmatprep.subr.mxu0 0.0
    %764 = vmatpush2.xpose.msra.mxu0 0.0
    %765 = vmatprep.subr.mxu0 0.0
    %766 = vmatpush2.xpose.msra.mxu0 0.0
    %767 = vmatprep.subr.mxu0 0.0
    %768 = vmatpush2.xpose.msra.mxu0 0.0
    %769 = vmatprep.subr.mxu0 0.0
    %770 = vmatpush2.xpose.msra.mxu0 0.0
    %771 = vmatprep.subr.mxu0 0.0
    %772 = vmatpush2.xpose.msra.mxu0 0.0
    %773 = vmatprep.subr.mxu0 0.0
    %774 = vmatpush2.xpose.msra.mxu0 0.0
    %775 = vmatprep.subr.mxu0 0.0
    %776 = vmatpush2.xpose.msra.mxu0 0.0
    %777 = vmatprep.mubr.f32.mxu0 0.0
    %v778 = vand.u32 %v53, 4294901760
    %779 = vmatmul.mubr.f32.gmra.mxu0 %v778
    %v780 = vpop.f32.mrf.mxu0
    %v781 = vadd.f32 %v688, %v780
    %v782 = vpop.f32.mrf.mxu0
    %783 = vmatprep.mubr.f32.mxu0 0.0
    %v784 = vand.u32 %v56, 4294901760
    %785 = vmatmul.mubr.f32.gmra.mxu0 %v784
    %v786 = vpop.f32.mrf.mxu0
    %v787 = vadd.f32 %v694, %v786
    %v788 = vpop.f32.mrf.mxu0
    %789 = vdwg.mxu0
    %v790 = vmax.f32 %v781, 0.0
    %v791 = vmax.f32 %v787, 0.0
    %v792 = vld [vmem:[%s3] sm:$0x3]
    %v793 = vld [vmem:[%s4] sm:$0x3]
    %795 = vset.pattern.permute.xlu0 0
    %796 = vperm.xlu0 %795, %v793
    %v797 = vpop.permute.xlu0 %796
    %v800 = vsel %vm51, %v792, 0
    %vm802 = vcmask 1041408
    %v804 = vsel %vm802, %v791, 0
    %806 = vmatprep.subr.mxu0 0.0
    %807 = vmatpush1.msra.mxu0 0.0
    %808 = vmatprep.subr.mxu0 0.0
    %809 = vmatpush1.msra.mxu0 0.0
    %810 = vmatprep.subr.mxu0 0.0
    %811 = vmatpush1.msra.mxu0 0.0
    %812 = vmatprep.subr.mxu0 0.0
    %813 = vmatpush1.msra.mxu0 0.0
    %814 = vmatprep.subr.mxu0 0.0
    %815 = vmatpush1.msra.mxu0 0.0
    %816 = vmatprep.subr.mxu0 0.0
    %817 = vmatpush1.msra.mxu0 0.0
    %818 = vmatprep.subr.mxu0 0.0
    %819 = vmatpush1.msra.mxu0 0.0
    %820 = vmatprep.subr.mxu0 0.0
    %821 = vmatpush1.msra.mxu0 0.0
    %822 = vmatprep.subr.mxu0 0.0
    %823 = vmatpush1.msra.mxu0 0.0
    %824 = vmatprep.subr.mxu0 0.0
    %825 = vmatpush1.msra.mxu0 0.0
    %826 = vmatprep.subr.mxu0 0.0
    %827 = vmatpush1.msra.mxu0 0.0
    %828 = vmatprep.subr.mxu0 0.0
    %829 = vmatpush1.msra.mxu0 0.0
    %830 = vmatprep.subr.mxu0 0.0
    %831 = vmatpush1.msra.mxu0 0.0
    %832 = vmatprep.subr.mxu0 0.0
    %833 = vmatpush1.msra.mxu0 0.0
    %834 = vmatprep.subr.mxu0 0.0
    %v835 = vand.u32 %v804, 4294901760
    %836 = vmatpush1.msra.mxu0 %v835
    %837 = vmatprep.subr.mxu0 0.0
    %v838 = vand.u32 %v790, 4294901760
    %839 = vmatpush1.msra.mxu0 %v838
    %840 = vmatprep.subr.mxu0 0.0
    %841 = vmatpush2.msra.mxu0 0.0
    %842 = vmatprep.subr.mxu0 0.0
    %843 = vmatpush2.msra.mxu0 0.0
    %844 = vmatprep.subr.mxu0 0.0
    %845 = vmatpush2.msra.mxu0 0.0
    %846 = vmatprep.subr.mxu0 0.0
    %847 = vmatpush2.msra.mxu0 0.0
    %848 = vmatprep.subr.mxu0 0.0
    %849 = vmatpush2.msra.mxu0 0.0
    %850 = vmatprep.subr.mxu0 0.0
    %851 = vmatpush2.msra.mxu0 0.0
    %852 = vmatprep.subr.mxu0 0.0
    %853 = vmatpush2.msra.mxu0 0.0
    %854 = vmatprep.subr.mxu0 0.0
    %855 = vmatpush2.msra.mxu0 0.0
    %856 = vmatprep.subr.mxu0 0.0
    %857 = vmatpush2.msra.mxu0 0.0
    %858 = vmatprep.subr.mxu0 0.0
    %859 = vmatpush2.msra.mxu0 0.0
    %860 = vmatprep.subr.mxu0 0.0
    %861 = vmatpush2.msra.mxu0 0.0
    %862 = vmatprep.subr.mxu0 0.0
    %863 = vmatpush2.msra.mxu0 0.0
    %864 = vmatprep.subr.mxu0 0.0
    %865 = vmatpush2.msra.mxu0 0.0
    %866 = vmatprep.subr.mxu0 0.0
    %867 = vmatpush2.msra.mxu0 0.0
    %868 = vmatprep.subr.mxu0 0.0
    %869 = vmatpush2.msra.mxu0 0.0
    %870 = vmatprep.subr.mxu0 0.0
    %871 = vmatpush2.msra.mxu0 0.0
    %872 = vmatprep.mubr.f32.mxu0 0.0
    %v873 = vand.u32 %v800, 4294901760
    %v874 = vsub.f32 %v800, %v873
    %v875 = vand.u32 %v874, 4294901760
    %v876 = vsub.f32 %v874, %v875
    %v877 = vand.u32 %v876, 4294901760
    %878 = vmatmul.mubr.f32.gmra.mxu0 %v877
    %v879 = vpop.f32.mrf.mxu0
    %v880 = vadd.f32 %v797, %v879
    %v881 = vpop.f32.mrf.mxu0
    %882 = vdwg.mxu0
    %883 = vmatprep.subr.mxu0 0.0
    %884 = vmatpush1.msra.mxu0 0.0
    %885 = vmatprep.subr.mxu0 0.0
    %886 = vmatpush1.msra.mxu0 0.0
    %887 = vmatprep.subr.mxu0 0.0
    %888 = vmatpush1.msra.mxu0 0.0
    %889 = vmatprep.subr.mxu0 0.0
    %890 = vmatpush1.msra.mxu0 0.0
    %891 = vmatprep.subr.mxu0 0.0
    %892 = vmatpush1.msra.mxu0 0.0
    %893 = vmatprep.subr.mxu0 0.0
    %894 = vmatpush1.msra.mxu0 0.0
    %895 = vmatprep.subr.mxu0 0.0
    %896 = vmatpush1.msra.mxu0 0.0
    %897 = vmatprep.subr.mxu0 0.0
    %898 = vmatpush1.msra.mxu0 0.0
    %899 = vmatprep.subr.mxu0 0.0
    %900 = vmatpush1.msra.mxu0 0.0
    %901 = vmatprep.subr.mxu0 0.0
    %902 = vmatpush1.msra.mxu0 0.0
    %903 = vmatprep.subr.mxu0 0.0
    %904 = vmatpush1.msra.mxu0 0.0
    %905 = vmatprep.subr.mxu0 0.0
    %906 = vmatpush1.msra.mxu0 0.0
    %907 = vmatprep.subr.mxu0 0.0
    %908 = vmatpush1.msra.mxu0 0.0
    %909 = vmatprep.subr.mxu0 0.0
    %910 = vmatpush1.msra.mxu0 0.0
    %911 = vmatprep.subr.mxu0 0.0
    %v912 = vand.u32 %v804, 4294901760
    %v913 = vsub.f32 %v804, %v912
    %v914 = vand.u32 %v913, 4294901760
    %v915 = vsub.f32 %v913, %v914
    %v916 = vand.u32 %v915, 4294901760
    %917 = vmatpush1.msra.mxu0 %v916
    %918 = vmatprep.subr.mxu0 0.0
    %v919 = vand.u32 %v790, 4294901760
    %v920 = vsub.f32 %v790, %v919
    %v921 = vand.u32 %v920, 4294901760
    %v922 = vsub.f32 %v920, %v921
    %v923 = vand.u32 %v922, 4294901760
    %924 = vmatpush1.msra.mxu0 %v923
    %925 = vmatprep.subr.mxu0 0.0
    %926 = vmatpush2.msra.mxu0 0.0
    %927 = vmatprep.subr.mxu0 0.0
    %928 = vmatpush2.msra.mxu0 0.0
    %929 = vmatprep.subr.mxu0 0.0
    %930 = vmatpush2.msra.mxu0 0.0
    %931 = vmatprep.subr.mxu0 0.0
    %932 = vmatpush2.msra.mxu0 0.0
    %933 = vmatprep.subr.mxu0 0.0
    %934 = vmatpush2.msra.mxu0 0.0
    %935 = vmatprep.subr.mxu0 0.0
    %936 = vmatpush2.msra.mxu0 0.0
    %937 = vmatprep.subr.mxu0 0.0
    %938 = vmatpush2.msra.mxu0 0.0
    %939 = vmatprep.subr.mxu0 0.0
    %940 = vmatpush2.msra.mxu0 0.0
    %941 = vmatprep.subr.mxu0 0.0
    %942 = vmatpush2.msra.mxu0 0.0
    %943 = vmatprep.subr.mxu0 0.0
    %944 = vmatpush2.msra.mxu0 0.0
    %945 = vmatprep.subr.mxu0 0.0
    %946 = vmatpush2.msra.mxu0 0.0
    %947 = vmatprep.subr.mxu0 0.0
    %948 = vmatpush2.msra.mxu0 0.0
    %949 = vmatprep.subr.mxu0 0.0
    %950 = vmatpush2.msra.mxu0 0.0
    %951 = vmatprep.subr.mxu0 0.0
    %952 = vmatpush2.msra.mxu0 0.0
    %953 = vmatprep.subr.mxu0 0.0
    %954 = vmatpush2.msra.mxu0 0.0
    %955 = vmatprep.subr.mxu0 0.0
    %956 = vmatpush2.msra.mxu0 0.0
    %957 = vmatprep.mubr.f32.mxu0 0.0
    %v958 = vand.u32 %v800, 4294901760
    %959 = vmatmul.mubr.f32.gmra.mxu0 %v958
    %v960 = vpop.f32.mrf.mxu0
    %v961 = vadd.f32 %v880, %v960
    %v962 = vpop.f32.mrf.mxu0
    %963 = vdwg.mxu0
    %964 = vmatprep.subr.mxu0 0.0
    %965 = vmatpush1.msra.mxu0 0.0
    %966 = vmatprep.subr.mxu0 0.0
    %967 = vmatpush1.msra.mxu0 0.0
    %968 = vmatprep.subr.mxu0 0.0
    %969 = vmatpush1.msra.mxu0 0.0
    %970 = vmatprep.subr.mxu0 0.0
    %971 = vmatpush1.msra.mxu0 0.0
    %972 = vmatprep.subr.mxu0 0.0
    %973 = vmatpush1.msra.mxu0 0.0
    %974 = vmatprep.subr.mxu0 0.0
    %975 = vmatpush1.msra.mxu0 0.0
    %976 = vmatprep.subr.mxu0 0.0
    %977 = vmatpush1.msra.mxu0 0.0
    %978 = vmatprep.subr.mxu0 0.0
    %979 = vmatpush1.msra.mxu0 0.0
    %980 = vmatprep.subr.mxu0 0.0
    %981 = vmatpush1.msra.mxu0 0.0
    %982 = vmatprep.subr.mxu0 0.0
    %983 = vmatpush1.msra.mxu0 0.0
    %984 = vmatprep.subr.mxu0 0.0
    %985 = vmatpush1.msra.mxu0 0.0
    %986 = vmatprep.subr.mxu0 0.0
    %987 = vmatpush1.msra.mxu0 0.0
    %988 = vmatprep.subr.mxu0 0.0
    %989 = vmatpush1.msra.mxu0 0.0
    %990 = vmatprep.subr.mxu0 0.0
    %991 = vmatpush1.msra.mxu0 0.0
    %992 = vmatprep.subr.mxu0 0.0
    %v993 = vand.u32 %v804, 4294901760
    %v994 = vsub.f32 %v804, %v993
    %995 = vmatpush1.msra.mxu0 %v994
    %996 = vmatprep.subr.mxu0 0.0
    %v997 = vand.u32 %v790, 4294901760
    %v998 = vsub.f32 %v790, %v997
    %999 = vmatpush1.msra.mxu0 %v998
    %1000 = vmatprep.subr.mxu0 0.0
    %1001 = vmatpush2.msra.mxu0 0.0
    %1002 = vmatprep.subr.mxu0 0.0
    %1003 = vmatpush2.msra.mxu0 0.0
    %1004 = vmatprep.subr.mxu0 0.0
    %1005 = vmatpush2.msra.mxu0 0.0
    %1006 = vmatprep.subr.mxu0 0.0
    %1007 = vmatpush2.msra.mxu0 0.0
    %1008 = vmatprep.subr.mxu0 0.0
    %1009 = vmatpush2.msra.mxu0 0.0
    %1010 = vmatprep.subr.mxu0 0.0
    %1011 = vmatpush2.msra.mxu0 0.0
    %1012 = vmatprep.subr.mxu0 0.0
    %1013 = vmatpush2.msra.mxu0 0.0
    %1014 = vmatprep.subr.mxu0 0.0
    %1015 = vmatpush2.msra.mxu0 0.0
    %1016 = vmatprep.subr.mxu0 0.0
    %1017 = vmatpush2.msra.mxu0 0.0
    %1018 = vmatprep.subr.mxu0 0.0
    %1019 = vmatpush2.msra.mxu0 0.0
    %1020 = vmatprep.subr.mxu0 0.0
    %1021 = vmatpush2.msra.mxu0 0.0
    %1022 = vmatprep.subr.mxu0 0.0
    %1023 = vmatpush2.msra.mxu0 0.0
    %1024 = vmatprep.subr.mxu0 0.0
    %1025 = vmatpush2.msra.mxu0 0.0
    %1026 = vmatprep.subr.mxu0 0.0
    %1027 = vmatpush2.msra.mxu0 0.0
    %1028 = vmatprep.subr.mxu0 0.0
    %1029 = vmatpush2.msra.mxu0 0.0
    %1030 = vmatprep.subr.mxu0 0.0
    %1031 = vmatpush2.msra.mxu0 0.0
    %1032 = vmatprep.mubr.f32.mxu0 0.0
    %v1033 = vand.u32 %v800, 4294901760
    %v1034 = vsub.f32 %v800, %v1033
    %1035 = vmatmul.mubr.f32.gmra.mxu0 %v1034
    %v1036 = vpop.f32.mrf.mxu0
    %v1037 = vadd.f32 %v961, %v1036
    %v1038 = vpop.f32.mrf.mxu0
    %1039 = vdwg.mxu0
    %1040 = vmatprep.subr.mxu0 0.0
    %1041 = vmatpush1.msra.mxu0 0.0
    %1042 = vmatprep.subr.mxu0 0.0
    %1043 = vmatpush1.msra.mxu0 0.0
    %1044 = vmatprep.subr.mxu0 0.0
    %1045 = vmatpush1.msra.mxu0 0.0
    %1046 = vmatprep.subr.mxu0 0.0
    %1047 = vmatpush1.msra.mxu0 0.0
    %1048 = vmatprep.subr.mxu0 0.0
    %1049 = vmatpush1.msra.mxu0 0.0
    %1050 = vmatprep.subr.mxu0 0.0
    %1051 = vmatpush1.msra.mxu0 0.0
    %1052 = vmatprep.subr.mxu0 0.0
    %1053 = vmatpush1.msra.mxu0 0.0
    %1054 = vmatprep.subr.mxu0 0.0
    %1055 = vmatpush1.msra.mxu0 0.0
    %1056 = vmatprep.subr.mxu0 0.0
    %1057 = vmatpush1.msra.mxu0 0.0
    %1058 = vmatprep.subr.mxu0 0.0
    %1059 = vmatpush1.msra.mxu0 0.0
    %1060 = vmatprep.subr.mxu0 0.0
    %1061 = vmatpush1.msra.mxu0 0.0
    %1062 = vmatprep.subr.mxu0 0.0
    %1063 = vmatpush1.msra.mxu0 0.0
    %1064 = vmatprep.subr.mxu0 0.0
    %1065 = vmatpush1.msra.mxu0 0.0
    %1066 = vmatprep.subr.mxu0 0.0
    %1067 = vmatpush1.msra.mxu0 0.0
    %1068 = vmatprep.subr.mxu0 0.0
    %v1069 = vand.u32 %v804, 4294901760
    %1070 = vmatpush1.msra.mxu0 %v1069
    %1071 = vmatprep.subr.mxu0 0.0
    %v1072 = vand.u32 %v790, 4294901760
    %1073 = vmatpush1.msra.mxu0 %v1072
    %1074 = vmatprep.subr.mxu0 0.0
    %1075 = vmatpush2.msra.mxu0 0.0
    %1076 = vmatprep.subr.mxu0 0.0
    %1077 = vmatpush2.msra.mxu0 0.0
    %1078 = vmatprep.subr.mxu0 0.0
    %1079 = vmatpush2.msra.mxu0 0.0
    %1080 = vmatprep.subr.mxu0 0.0
    %1081 = vmatpush2.msra.mxu0 0.0
    %1082 = vmatprep.subr.mxu0 0.0
    %1083 = vmatpush2.msra.mxu0 0.0
    %1084 = vmatprep.subr.mxu0 0.0
    %1085 = vmatpush2.msra.mxu0 0.0
    %1086 = vmatprep.subr.mxu0 0.0
    %1087 = vmatpush2.msra.mxu0 0.0
    %1088 = vmatprep.subr.mxu0 0.0
    %1089 = vmatpush2.msra.mxu0 0.0
    %1090 = vmatprep.subr.mxu0 0.0
    %1091 = vmatpush2.msra.mxu0 0.0
    %1092 = vmatprep.subr.mxu0 0.0
    %1093 = vmatpush2.msra.mxu0 0.0
    %1094 = vmatprep.subr.mxu0 0.0
    %1095 = vmatpush2.msra.mxu0 0.0
    %1096 = vmatprep.subr.mxu0 0.0
    %1097 = vmatpush2.msra.mxu0 0.0
    %1098 = vmatprep.subr.mxu0 0.0
    %1099 = vmatpush2.msra.mxu0 0.0
    %1100 = vmatprep.subr.mxu0 0.0
    %1101 = vmatpush2.msra.mxu0 0.0
    %1102 = vmatprep.subr.mxu0 0.0
    %1103 = vmatpush2.msra.mxu0 0.0
    %1104 = vmatprep.subr.mxu0 0.0
    %1105 = vmatpush2.msra.mxu0 0.0
    %1106 = vmatprep.mubr.f32.mxu0 0.0
    %v1107 = vand.u32 %v800, 4294901760
    %v1108 = vsub.f32 %v800, %v1107
    %v1109 = vand.u32 %v1108, 4294901760
    %1110 = vmatmul.mubr.f32.gmra.mxu0 %v1109
    %v1111 = vpop.f32.mrf.mxu0
    %v1112 = vadd.f32 %v1037, %v1111
    %v1113 = vpop.f32.mrf.mxu0
    %1114 = vdwg.mxu0
    %1115 = vmatprep.subr.mxu0 0.0
    %1116 = vmatpush1.msra.mxu0 0.0
    %1117 = vmatprep.subr.mxu0 0.0
    %1118 = vmatpush1.msra.mxu0 0.0
    %1119 = vmatprep.subr.mxu0 0.0
    %1120 = vmatpush1.msra.mxu0 0.0
    %1121 = vmatprep.subr.mxu0 0.0
    %1122 = vmatpush1.msra.mxu0 0.0
    %1123 = vmatprep.subr.mxu0 0.0
    %1124 = vmatpush1.msra.mxu0 0.0
    %1125 = vmatprep.subr.mxu0 0.0
    %1126 = vmatpush1.msra.mxu0 0.0
    %1127 = vmatprep.subr.mxu0 0.0
    %1128 = vmatpush1.msra.mxu0 0.0
    %1129 = vmatprep.subr.mxu0 0.0
    %1130 = vmatpush1.msra.mxu0 0.0
    %1131 = vmatprep.subr.mxu0 0.0
    %1132 = vmatpush1.msra.mxu0 0.0
    %1133 = vmatprep.subr.mxu0 0.0
    %1134 = vmatpush1.msra.mxu0 0.0
    %1135 = vmatprep.subr.mxu0 0.0
    %1136 = vmatpush1.msra.mxu0 0.0
    %1137 = vmatprep.subr.mxu0 0.0
    %1138 = vmatpush1.msra.mxu0 0.0
    %1139 = vmatprep.subr.mxu0 0.0
    %1140 = vmatpush1.msra.mxu0 0.0
    %1141 = vmatprep.subr.mxu0 0.0
    %1142 = vmatpush1.msra.mxu0 0.0
    %1143 = vmatprep.subr.mxu0 0.0
    %v1144 = vand.u32 %v804, 4294901760
    %v1145 = vsub.f32 %v804, %v1144
    %v1146 = vand.u32 %v1145, 4294901760
    %1147 = vmatpush1.msra.mxu0 %v1146
    %1148 = vmatprep.subr.mxu0 0.0
    %v1149 = vand.u32 %v790, 4294901760
    %v1150 = vsub.f32 %v790, %v1149
    %v1151 = vand.u32 %v1150, 4294901760
    %1152 = vmatpush1.msra.mxu0 %v1151
    %1153 = vmatprep.subr.mxu0 0.0
    %1154 = vmatpush2.msra.mxu0 0.0
    %1155 = vmatprep.subr.mxu0 0.0
    %1156 = vmatpush2.msra.mxu0 0.0
    %1157 = vmatprep.subr.mxu0 0.0
    %1158 = vmatpush2.msra.mxu0 0.0
    %1159 = vmatprep.subr.mxu0 0.0
    %1160 = vmatpush2.msra.mxu0 0.0
    %1161 = vmatprep.subr.mxu0 0.0
    %1162 = vmatpush2.msra.mxu0 0.0
    %1163 = vmatprep.subr.mxu0 0.0
    %1164 = vmatpush2.msra.mxu0 0.0
    %1165 = vmatprep.subr.mxu0 0.0
    %1166 = vmatpush2.msra.mxu0 0.0
    %1167 = vmatprep.subr.mxu0 0.0
    %1168 = vmatpush2.msra.mxu0 0.0
    %1169 = vmatprep.subr.mxu0 0.0
    %1170 = vmatpush2.msra.mxu0 0.0
    %1171 = vmatprep.subr.mxu0 0.0
    %1172 = vmatpush2.msra.mxu0 0.0
    %1173 = vmatprep.subr.mxu0 0.0
    %1174 = vmatpush2.msra.mxu0 0.0
    %1175 = vmatprep.subr.mxu0 0.0
    %1176 = vmatpush2.msra.mxu0 0.0
    %1177 = vmatprep.subr.mxu0 0.0
    %1178 = vmatpush2.msra.mxu0 0.0
    %1179 = vmatprep.subr.mxu0 0.0
    %1180 = vmatpush2.msra.mxu0 0.0
    %1181 = vmatprep.subr.mxu0 0.0
    %1182 = vmatpush2.msra.mxu0 0.0
    %1183 = vmatprep.subr.mxu0 0.0
    %1184 = vmatpush2.msra.mxu0 0.0
    %1185 = vmatprep.mubr.f32.mxu0 0.0
    %v1186 = vand.u32 %v800, 4294901760
    %1187 = vmatmul.mubr.f32.gmra.mxu0 %v1186
    %v1188 = vpop.f32.mrf.mxu0
    %v1189 = vadd.f32 %v1112, %v1188
    %v1190 = vpop.f32.mrf.mxu0
    %1191 = vdwg.mxu0
    %1192 = vmatprep.subr.mxu0 0.0
    %1193 = vmatpush1.msra.mxu0 0.0
    %1194 = vmatprep.subr.mxu0 0.0
    %1195 = vmatpush1.msra.mxu0 0.0
    %1196 = vmatprep.subr.mxu0 0.0
    %1197 = vmatpush1.msra.mxu0 0.0
    %1198 = vmatprep.subr.mxu0 0.0
    %1199 = vmatpush1.msra.mxu0 0.0
    %1200 = vmatprep.subr.mxu0 0.0
    %1201 = vmatpush1.msra.mxu0 0.0
    %1202 = vmatprep.subr.mxu0 0.0
    %1203 = vmatpush1.msra.mxu0 0.0
    %1204 = vmatprep.subr.mxu0 0.0
    %1205 = vmatpush1.msra.mxu0 0.0
    %1206 = vmatprep.subr.mxu0 0.0
    %1207 = vmatpush1.msra.mxu0 0.0
    %1208 = vmatprep.subr.mxu0 0.0
    %1209 = vmatpush1.msra.mxu0 0.0
    %1210 = vmatprep.subr.mxu0 0.0
    %1211 = vmatpush1.msra.mxu0 0.0
    %1212 = vmatprep.subr.mxu0 0.0
    %1213 = vmatpush1.msra.mxu0 0.0
    %1214 = vmatprep.subr.mxu0 0.0
    %1215 = vmatpush1.msra.mxu0 0.0
    %1216 = vmatprep.subr.mxu0 0.0
    %1217 = vmatpush1.msra.mxu0 0.0
    %1218 = vmatprep.subr.mxu0 0.0
    %1219 = vmatpush1.msra.mxu0 0.0
    %1220 = vmatprep.subr.mxu0 0.0
    %v1221 = vand.u32 %v804, 4294901760
    %1222 = vmatpush1.msra.mxu0 %v1221
    %1223 = vmatprep.subr.mxu0 0.0
    %v1224 = vand.u32 %v790, 4294901760
    %1225 = vmatpush1.msra.mxu0 %v1224
    %1226 = vmatprep.subr.mxu0 0.0
    %1227 = vmatpush2.msra.mxu0 0.0
    %1228 = vmatprep.subr.mxu0 0.0
    %1229 = vmatpush2.msra.mxu0 0.0
    %1230 = vmatprep.subr.mxu0 0.0
    %1231 = vmatpush2.msra.mxu0 0.0
    %1232 = vmatprep.subr.mxu0 0.0
    %1233 = vmatpush2.msra.mxu0 0.0
    %1234 = vmatprep.subr.mxu0 0.0
    %1235 = vmatpush2.msra.mxu0 0.0
    %1236 = vmatprep.subr.mxu0 0.0
    %1237 = vmatpush2.msra.mxu0 0.0
    %1238 = vmatprep.subr.mxu0 0.0
    %1239 = vmatpush2.msra.mxu0 0.0
    %1240 = vmatprep.subr.mxu0 0.0
    %1241 = vmatpush2.msra.mxu0 0.0
    %1242 = vmatprep.subr.mxu0 0.0
    %1243 = vmatpush2.msra.mxu0 0.0
    %1244 = vmatprep.subr.mxu0 0.0
    %1245 = vmatpush2.msra.mxu0 0.0
    %1246 = vmatprep.subr.mxu0 0.0
    %1247 = vmatpush2.msra.mxu0 0.0
    %1248 = vmatprep.subr.mxu0 0.0
    %1249 = vmatpush2.msra.mxu0 0.0
    %1250 = vmatprep.subr.mxu0 0.0
    %1251 = vmatpush2.msra.mxu0 0.0
    %1252 = vmatprep.subr.mxu0 0.0
    %1253 = vmatpush2.msra.mxu0 0.0
    %1254 = vmatprep.subr.mxu0 0.0
    %1255 = vmatpush2.msra.mxu0 0.0
    %1256 = vmatprep.subr.mxu0 0.0
    %1257 = vmatpush2.msra.mxu0 0.0
    %1258 = vmatprep.mubr.f32.mxu0 0.0
    %v1259 = vand.u32 %v800, 4294901760
    %1260 = vmatmul.mubr.f32.gmra.mxu0 %v1259
    %v1261 = vpop.f32.mrf.mxu0
    %v1262 = vadd.f32 %v1189, %v1261
    %v1263 = vpop.f32.mrf.mxu0
    %1264 = vdwg.mxu0
    %v1266 = vrot.slane %v1262, 1
    %v1268 = vsub.f32 %v1262, %v1266
    %v1269 = vsub.f32 0.0, %v1268
    %v1270 = vmul.f32 %v1269, 1.442695
    %v1271 = vpow.pop %v1270
    %v1272 = vadd.f32 %v1271, 1.0
    %v1273 = vrcp.pop %v1272
    %1274 = vst [vmem:[#allocation2] sm:$0x1] %v1273
    %v1275 = vsub.f32 1.0, %v1273
    %1276 = vst [vmem:[#allocation2 + $0x1] sm:$0x1] %v1275
    // Predicated region
    $region22: #{predictor_forward.1} parent=1 // pred_check
      _
    $region23: #{predictor_forward.1} parent=1 // pred_check_branch
      %1278 = sbr.rel (0) target = $region25
    $region24: #{predictor_forward.1} parent=1 // pred_region
      %s1280 = ssub.s32 32, 32
      %1281 = vsyncadd [#allocation3], %s1280
      %s1283 = sshll.u32 [#allocation2], 4
      %s1284 = int_to_ptr.vmem [resolvable:$true] %s1283
      %1286 = dma.vmem_to_hbm [thread:$0]  %s1284, 32, %s5, [#allocation3]
    $region25: #{predictor_forward.1} parent=1 // pred_fallthru
      _
    // Predicated region
    $region26: #{predictor_forward.1} parent=1 // pred_check
      _
    $region27: #{predictor_forward.1} parent=1 // pred_check_branch
      %1288 = sbr.rel (0) target = $region29
    $region28: #{predictor_forward.1} parent=1 // pred_region
      %1289 = dma.done [#allocation3], 32
    $region29: #{predictor_forward.1} parent=1 // pred_fallthru
      _
    %1290 = vsyncpa [#allocation3], 1

</llo_original>
